<compile_context>
chip_gen: v7x
topology: tpu7x:2x2x1
jax: 0.10.0
libtpu: 0.0.40
codegen_flags: <defaults>
</compile_context>

<pallas_src>
import functools

import jax
import jax.numpy as jnp
from jax.experimental import pallas as pl
from jax.experimental.pallas import tpu as pltpu


def _round_up(x, m):
    return ((x + m - 1) // m) * m


def _value_embedding_gather_kernel(
    ids_ref,     # SMEM (N_pad,) int32           -- scalar-prefetched token ids
    table_hbm,   # ANY  (n_head, vocab, n_embd)  -- embedding tables in HBM
    out_ref,     # VMEM (1, tile_n, n_embd)      -- output tile for (head, tile)
    rows_vmem,   # VMEM (tile_n, n_embd)         -- gather landing buffer
    sem,         # DMA semaphore shared by all row copies of this grid step
):
    h = pl.program_id(0)
    t = pl.program_id(1)
    tile_n = rows_vmem.shape[0]
    base = t * tile_n

    # Issue all row gathers for this tile; they stay in flight concurrently so
    # the DMA engine is kept busy (per-row size = n_embd * dtype bytes).
    @pl.loop(0, tile_n)
    def _start(i):
        tok = ids_ref[base + i]
        pltpu.make_async_copy(
            table_hbm.at[h, pl.ds(tok, 1)],   # (1, n_embd) row in HBM
            rows_vmem.at[pl.ds(i, 1)],        # (1, n_embd) row in VMEM
            sem,
        ).start()

    # Drain the shared semaphore: all copies have identical shape, so one
    # wait per issued copy is correct regardless of completion order.
    @pl.loop(0, tile_n)
    def _wait(i):
        pltpu.make_async_copy(
            table_hbm.at[0, pl.ds(0, 1)],
            rows_vmem.at[pl.ds(i, 1)],
            sem,
        ).wait()

    # Lane-dense store into the pipelined output block (writeback of this tile
    # overlaps the next grid step's gathers via the standard output
    # double-buffering).
    out_ref[0] = rows_vmem[...]


@functools.partial(jax.jit, static_argnames=("tile_n",))
def value_embedding_lookup(inputs, tables, tile_n=256):
    """inputs: (B, T) int token ids; tables: (n_head, vocab, n_embd).

    Returns stacked per-head embeddings of shape (n_head, B, T, n_embd),
    with out dtype == tables.dtype (matching nn.Embedding semantics).
    """
    B, T = inputs.shape
    n_head, vocab, n_embd = tables.shape
    N = B * T

    # Token-axis tile: multiple of 8 sublanes, capped at tile_n; pad N up to a
    # whole number of tiles (pad ids with 0 -- a valid row -- and slice after).
    tile = min(int(tile_n), _round_up(N, 8))
    tile = _round_up(tile, 8)
    n_pad = _round_up(N, tile)
    num_tiles = n_pad // tile

    ids = inputs.reshape(N).astype(jnp.int32)
    if n_pad != N:
        ids = jnp.concatenate([ids, jnp.zeros((n_pad - N,), dtype=jnp.int32)])

    itemsize = jnp.dtype(tables.dtype).itemsize
    out = pl.pallas_call(
        _value_embedding_gather_kernel,
        out_shape=jax.ShapeDtypeStruct((n_head, n_pad, n_embd), tables.dtype),
        grid_spec=pltpu.PrefetchScalarGridSpec(
            num_scalar_prefetch=1,                  # ids -> SMEM
            grid=(n_head, num_tiles),
            in_specs=[
                pl.BlockSpec(memory_space=pl.ANY),  # tables stay in HBM
            ],
            out_specs=pl.BlockSpec(
                (1, tile, n_embd), lambda h, t, ids: (h, t, 0)
            ),
            scratch_shapes=[
                pltpu.VMEM((tile, n_embd), tables.dtype),
                pltpu.SemaphoreType.DMA(()),
            ],
        ),
        compiler_params=pltpu.CompilerParams(
            # Both grid axes are independent -> shardable across TensorCores
            # on multi-core chips; neutral on single-core v5e/v6e.
            dimension_semantics=("parallel", "parallel"),
        ),
        cost_estimate=pl.CostEstimate(
            flops=0,
            transcendentals=0,
            # gather reads + output writeback; traffic is O(tokens), not vocab.
            bytes_accessed=2 * n_head * n_pad * n_embd * itemsize,
        ),
    )(ids, tables)

    return out[:, :N, :].reshape(n_head, B, T, n_embd)


def value_embedding_forward(inputs, tables):
    """Full ValueEmbedding.forward: list of 2*n_head tensors (B, T, n_embd)."""
    stacked = value_embedding_lookup(inputs, tables)
    n_head = stacked.shape[0]
    ve = [stacked[h] for h in range(n_head)]
    ve = ve + list(reversed(ve))
    return ve


if __name__ == "__main__":
    # Small config consistent with the module.
    vocab_size = 32
    n_embd = 32
    n_head = 4
    B, T = 2, 8

    key = jax.random.PRNGKey(0)
    k_ids, k_tab = jax.random.split(key)

    # Deterministic parameter init (nn.Embedding default: N(0, 1)).
    tables = jax.random.normal(
        k_tab, (n_head, vocab_size, n_embd), dtype=jnp.float32
    )
    inputs = jax.random.randint(k_ids, (B, T), 0, vocab_size, dtype=jnp.int32)

    ve = value_embedding_forward(inputs, tables)
    ve = [jax.block_until_ready(v) for v in ve]

    # Sanity checks against a pure-JAX reference.
    assert len(ve) == 2 * n_head
    for h in range(n_head):
        ref = tables[h][inputs]  # plain JAX gather reference
        assert ve[h].shape == (B, T, n_embd)
        assert jnp.allclose(ve[h], ref, atol=1e-6), f"head {h} mismatch"
        # reversed second half aliases first half in value
        assert jnp.allclose(ve[2 * n_head - 1 - h], ve[h])

    print("KERNEL_OK")
</pallas_src>

<mosaic_0001>
module attributes {stable_mosaic.version = 11 : i64} {
  func.func @_value_embedding_gather_kernel(%arg0: i32, %arg1: i32, %arg2: memref<16xi32, #tpu.memory_space<smem>>, %arg3: memref<4x32x32xf32, #tpu.memory_space<any>>, %arg4: memref<1x16x32xf32, #tpu.memory_space<vmem>>, %arg5: memref<16x32xf32, #tpu.memory_space<vmem>>, %arg6: memref<!tpu.dma_semaphore, #tpu.memory_space<semaphore_mem>>) attributes {dimension_semantics = [#tpu.dimension_semantics<parallel>, #tpu.dimension_semantics<parallel>], iteration_bounds = array<i64: 4, 1>, scalar_prefetch = 1 : i64, scratch_operands = 2 : i64, tpu.core_type = #tpu.core_type<tc>, window_params = [{}, {transform_indices = @transform_1, window_bounds = array<i64: 1, 16, 32>}]} {
    %c16_i32 = arith.constant 16 : i32
    %0 = arith.muli %arg1, %c16_i32 : i32
    %c0_i32 = arith.constant 0 : i32
    %c16_i32_0 = arith.constant 16 : i32
    %1 = arith.addi %c0_i32, %c16_i32_0 : i32
    %c1_i32 = arith.constant 1 : i32
    scf.for %arg7 = %c0_i32 to %1 step %c1_i32  : i32 {
      %c1_i32_10 = arith.constant 1 : i32
      %7 = arith.muli %arg7, %c1_i32_10 : i32
      %c0_i32_11 = arith.constant 0 : i32
      %8 = arith.addi %c0_i32_11, %7 : i32
      %9 = arith.addi %0, %8 : i32
      %10 = arith.index_cast %9 : i32 to index
      %11 = memref.load %arg2[%10] : memref<16xi32, #tpu.memory_space<smem>>
      %c0_i32_12 = arith.constant 0 : i32
      %12 = tpu.memref_slice %arg3[%arg0, %11, %c0_i32_12] : memref<4x32x32xf32, #tpu.memory_space<any>> -> memref<1x1x32xf32, #tpu.memory_space<any>>
      %13 = tpu.memref_squeeze %12 : memref<1x1x32xf32, #tpu.memory_space<any>> -> memref<1x32xf32, #tpu.memory_space<any>>
      %c0_i32_13 = arith.constant 0 : i32
      %14 = tpu.memref_slice %arg5[%8, %c0_i32_13] : memref<16x32xf32, #tpu.memory_space<vmem>> -> memref<1x32xf32, #tpu.memory_space<vmem>>
      tpu.enqueue_dma source(%13 : memref<1x32xf32, #tpu.memory_space<any>>) target(%14 : memref<1x32xf32, #tpu.memory_space<vmem>>) target_semaphore(%arg6 : memref<!tpu.dma_semaphore, #tpu.memory_space<semaphore_mem>>)
    }
    %c16_i32_1 = arith.constant 16 : i32
    %c0_i32_2 = arith.constant 0 : i32
    %c16_i32_3 = arith.constant 16 : i32
    %2 = arith.addi %c0_i32_2, %c16_i32_3 : i32
    %c1_i32_4 = arith.constant 1 : i32
    scf.for %arg7 = %c0_i32_2 to %2 step %c1_i32_4  : i32 {
      %c1_i32_10 = arith.constant 1 : i32
      %7 = arith.muli %arg7, %c1_i32_10 : i32
      %c0_i32_11 = arith.constant 0 : i32
      %8 = arith.addi %c0_i32_11, %7 : i32
      %c0_i32_12 = arith.constant 0 : i32
      %c0_i32_13 = arith.constant 0 : i32
      %c0_i32_14 = arith.constant 0 : i32
      %9 = tpu.memref_slice %arg3[%c0_i32_12, %c0_i32_13, %c0_i32_14] : memref<4x32x32xf32, #tpu.memory_space<any>> -> memref<1x1x32xf32, #tpu.memory_space<any>>
      %10 = tpu.memref_squeeze %9 : memref<1x1x32xf32, #tpu.memory_space<any>> -> memref<1x32xf32, #tpu.memory_space<any>>
      %c0_i32_15 = arith.constant 0 : i32
      %11 = tpu.memref_slice %arg5[%8, %c0_i32_15] : memref<16x32xf32, #tpu.memory_space<vmem>> -> memref<1x32xf32, #tpu.memory_space<vmem>>
      tpu.wait_dma2 semaphore(%arg6 : memref<!tpu.dma_semaphore, #tpu.memory_space<semaphore_mem>>) src(%10 : memref<1x32xf32, #tpu.memory_space<any>>) dst(%11 : memref<1x32xf32, #tpu.memory_space<vmem>>)
    }
    %c16_i32_5 = arith.constant 16 : i32
    %c0 = arith.constant 0 : index
    %c0_6 = arith.constant 0 : index
    %3 = vector.load %arg5[%c0, %c0_6] : memref<16x32xf32, #tpu.memory_space<vmem>>, vector<16x32xf32>
    %c0_7 = arith.constant 0 : index
    %c0_8 = arith.constant 0 : index
    %c0_9 = arith.constant 0 : index
    %4 = vector.load %arg4[%c0_7, %c0_8, %c0_9] : memref<1x16x32xf32, #tpu.memory_space<vmem>>, vector<1x16x32xf32>
    %5 = vector.shape_cast %4 : vector<1x16x32xf32> to vector<16x32xf32>
    %6 = vector.shape_cast %3 : vector<16x32xf32> to vector<1x16x32xf32>
    tpu.vector_store %arg4[%c0_7, %c0_8, %c0_9], %6 {strides = array<i32>} : memref<1x16x32xf32, #tpu.memory_space<vmem>>, vector<1x16x32xf32>,
    return
  }
  func.func @transform_1(%arg0: i32, %arg1: i32, %arg2: memref<16xi32, #tpu.memory_space<smem>>) -> (i32, i32, i32) {
    %c0_i32 = arith.constant 0 : i32
    %c0_i32_0 = arith.constant 0 : i32
    return %arg0, %arg1, %c0_i32 : i32, i32, i32
  }
}

</mosaic_0001>

<llo_original>
// kernel: value_embedding_lookup.1
$region0: #{value_embedding_lookup.1}
  #allocation0 [shape = 'u32[]', space=smem, size = 0x4, offset = 0x4, fixed_abs, tag = 'smem constant byte address 0x4 - core index']
  #allocation1 [shape = 'u32[144,128]{1,0:T(1,128)}', space=vmem, size = 0x12000, scoped, tag = 'internal scratch']
  #allocation2 [shape = 'f32[16,32]{1,0:T(8,128)}', space=vmem, size = 0x2000, scoped, tag = 'scratch operand']
  #allocation3 [shape = 's32[1]{0}', space=sflag, size = 0x4, scoped, tag = 'scratch operand']
  #allocation4 [shape = 's32[1]{0}', space=sflag, size = 0x4, scoped, tag = 'scoped memory for value_embedding_lookup.1']
  #allocation5 [shape = 'u8[512]{0}', space=smem, size = 0x200, scoped, tag = 'prefetched SMEM operand 0']
  #allocation8 [shape = 's32[]', space=sflag, size = 0x4, offset = 0, fixed_abs, tag = 'sflag constant byte address 0x0 - dummy sync flag']
  #allocation9 [shape = 's32[]', space=sflag, size = 0x4, offset = 0, fixed_abs, tag = 'sflag constant byte address 0x0 - dummy sync flag']
  #allocation10 [shape = 'u32[]', space=smem, size = 0x4, offset = 0x44, fixed_abs, tag = 'smem constant byte address 0x44 - assertion arg 0']
  #allocation11 [shape = 'u32[]', space=smem, size = 0x4, offset = 0x48, fixed_abs, tag = 'smem constant byte address 0x48 - assertion arg 1']
  %s0 = inlined_call_operand.vmem [shape: s32[16], index: 0, kind: input, shape index: {}]
  %s1 = inlined_call_operand.hbm [shape: f32[4,32,32], index: 1, kind: input, shape index: {}]
  %s2 = inlined_call_operand.hbm [shape: f32[4,16,32], index: 2, kind: output, shape index: {}]
  %s3 = sld [smem:[#allocation0]]
  $region43: #{value_embedding_lookup.1} parent=0
    _
  %s5 = ssub.s32 1, %s3
  %s6 = scalar_select 0, %s5, %s3
  %s7 = sshll.u32 %s0, 4
  %s8 = int_to_ptr.vmem [resolvable:$true] %s7
  %10 = dma.vmem_to_smem %s8, 16, [#allocation5], [#allocation4]
  %11 = dma.done [#allocation4], 16
  %12 = sfence
  $region1: #{value_embedding_lookup.1} parent=0
    #allocation6 [shape = 'u8[16384]{0}', space=vmem, size = 0x4000, scoped, tag = 'output window, operand 0']
    #allocation7 [shape = 's32[2]{0}', space=sflag, size = 0x8, scoped, tag = 'scoped memory for value_embedding_lookup.1']
    %13 = vsyncpa [#allocation7], 0
    %s14 = scalar_lea.sflag [#allocation7], 1
    %15 = vsyncpa %s14, 0
    loop: start=0, step=1, limit=5
    $region2: #{value_embedding_lookup.1} parent=1 // loop_pre_header
      _
    $region3: #{value_embedding_lookup.1} parent=1 // loop_header
      %s17 = sphi 0, %s21
      %p18 = scmp.ge.s32.totalorder %s17, 5
      %s23 = sphi 0, %s33
      %s24 = sphi 0, %s29
      %s25 = sphi 0, %s23
      %s26 = sphi 0, %s24
      %s38 = sphi 0, %s40
      %s41 = sphi 0, %s38
      %s51 = sphi 0, %s41
    $region4: #{value_embedding_lookup.1} parent=1 // loop_header_branch
      %20 = sbr.rel (%p18) target = $region8
    $region5: #{value_embedding_lookup.1} parent=1 // loop_body
      %s22 = ssub.s32 %s17, 1
      %s27 = sadd.s32 1, %s24
      %p28 = scmp.ge.s32.totalorder %s27, 1
      %s29 = scalar_select %p28, 0, %s27
      %s30 = sadd.s32 1, %s23
      %s31 = scalar_select %p28, %s30, %s23
      %p32 = scmp.ge.s32.totalorder %s31, 4
      %s33 = scalar_select %p32, 0, %s31
      %s34 = ssub.s32 %s23, %s33
      %s35 = ssub.s32 %s24, %s29
      %s36 = sor.u32 %s34, %s35
      %p37 = scmp.eq.s32.totalorder %s36, 0
      %s39 = sadd.s32 %s38, 1
      %s40 = scalar_select %p37, %s38, %s39
      %p42 = pneg %p37
      %p43 = scmp.eq.s32.totalorder %s17, 3
      %p44 = por %p42, %p43
      %p45 = scmp.ne.s32.totalorder %s38, %s41
      %p46 = scmp.eq.s32.totalorder %s17, 0
      %p47 = por %p45, %p46
      %p48 = scmp.ne.s32.totalorder %s38, %s41
      %p49 = scmp.eq.s32.totalorder %s22, 3
      %p50 = por %p48, %p49
      %p52 = scmp.ne.s32.totalorder %s41, %s51
      %p53 = scmp.eq.s32.totalorder %s22, 0
      %p54 = por %p52, %p53
      %p55 = scmp.lt.s32.totalorder %s17, 4
      // Predicated region
      $region9: #{value_embedding_lookup.1} parent=5 // pred_check
        %p56 = pneg %p55
      $region10: #{value_embedding_lookup.1} parent=5 // pred_check_branch
        %58 = sbr.rel (%p56) target = $region12
      $region11: #{value_embedding_lookup.1} parent=5 // pred_region
        %p59 = pneg %p47
        %p60 = pneg %p44
        %s61 = sand.u32 %s38, 1
        %s62 = scalar_lea.sflag [#allocation7], %s61
        %s63 = sand.u32 %s38, 1
        %s64 = smul.addr %s63, 16
        %s65 = scalar_lea.vmem [#allocation6], %s64
        %s66 = smul.u32 2, %s24
        %s67 = smul.u32 %s24, 16
        loop: start=0, step=1, limit=16
        $region13: #{value_embedding_lookup.1} parent=11 // loop_pre_header
          _
        $region14: #{value_embedding_lookup.1} parent=11 // loop_header
          %s69 = sphi 0, %s73
          %p70 = scmp.ge.s32.totalorder %s69, 16
        $region15: #{value_embedding_lookup.1} parent=11 // loop_header_branch
          %72 = sbr.rel (%p70) target = $region19
        $region16: #{value_embedding_lookup.1} parent=11 // loop_body
          %s74 = sadd.s32 %s67, %s69
          %s75 = sld [smem:[#allocation5 + %s74]]
          %s76 = smul.u32 %s23, 32
          %s77 = sadd.s32 %s75, %s76
          %s78 = smul.addr %s77, 16
          %s79 = scalar_lea.hbm %s1, %s78
          %s80 = scalar_lea.vmem [#allocation2], %s69
          // Predicated region
          $region20: #{value_embedding_lookup.1} parent=16 // pred_check
            _
          $region21: #{value_embedding_lookup.1} parent=16 // pred_check_branch
            %82 = sbr.rel target = $region23
          $region22: #{value_embedding_lookup.1} parent=16 // pred_region
            %83 = sst [smem:[#allocation10]] [#allocation9]
            %84 = sst [smem:[#allocation11]] [#allocation8]
          $region23: #{value_embedding_lookup.1} parent=16 // pred_fallthru
            _
          %86 = shalt.err (0)
          %s88 = sshll.u32 %s80, 4
          %s89 = int_to_ptr.vmem [resolvable:$true] %s88
          %91 = dma.hbm_to_vmem [thread:$0]  %s79, 16, %s89, [#allocation3]
        $region17: #{value_embedding_lookup.1} parent=11 // loop_footer
          %s73 = sadd.s32 1, %s69
        $region18: #{value_embedding_lookup.1} parent=11 // loop_footer_branch
          %68 = sbr.rel target = $region14
        $region19: #{value_embedding_lookup.1} parent=11 // loop_exit
          _
        loop: start=0, step=1, limit=16
        $region24: #{value_embedding_lookup.1} parent=11 // loop_pre_header
          _
        $region25: #{value_embedding_lookup.1} parent=11 // loop_header
          %s93 = sphi 0, %s97
          %p94 = scmp.ge.s32.totalorder %s93, 16
        $region26: #{value_embedding_lookup.1} parent=11 // loop_header_branch
          %96 = sbr.rel (%p94) target = $region30
        $region27: #{value_embedding_lookup.1} parent=11 // loop_body
          %s98 = smul.u32 1, 1
          %s99 = sshll.u32 %s98, 4
          %100 = dma.done [#allocation3], %s99
        $region28: #{value_embedding_lookup.1} parent=11 // loop_footer
          %s97 = sadd.s32 1, %s93
        $region29: #{value_embedding_lookup.1} parent=11 // loop_footer_branch
          %92 = sbr.rel target = $region25
        $region30: #{value_embedding_lookup.1} parent=11 // loop_exit
          _
        %v101 = vld [vmem:[#allocation2] sm:$0xff]
        %v102 = vld [vmem:[#allocation2 + $0x8] sm:$0xff]
        %vm103 = vcmask 261120
        %104 = vst.msk [vmem:[%s65] sm:$0xff] %vm103, %v101
        %105 = vst.msk [vmem:[%s65 + $0x8] sm:$0xff] %vm103, %v102
        %s106 = sand.u32 %s38, 1
        %s107 = scalar_lea.sflag [#allocation7], %s106
        %s108 = sand.u32 %s38, 1
        %s109 = smul.addr %s108, 16
        %s110 = scalar_lea.vmem [#allocation6], %s109
        // Predicated region
        $region31: #{value_embedding_lookup.1} parent=11 // pred_check
          %p111 = pneg %p44
        $region32: #{value_embedding_lookup.1} parent=11 // pred_check_branch
          %113 = sbr.rel (%p111) target = $region34
        $region33: #{value_embedding_lookup.1} parent=11 // pred_region
          %s114 = smul.u32 2, %s24
          %s116 = ssub.s32 256, 256
          %117 = vsyncadd %s107, %s116
          %s118 = smul.addr %s23, 2
          %s119 = sadd.s32 %s114, %s118
          %s120 = smul.addr %s119, 128
          %s121 = scalar_lea.hbm %s2, %s120
          %s122 = sshll.u32 %s110, 4
          %s123 = int_to_ptr.vmem [resolvable:$true] %s122
          %128 = dma.vmem_to_hbm [thread:$0]  %s123, 256, %s121, %s107, 128, 128, 8
        $region34: #{value_embedding_lookup.1} parent=11 // pred_fallthru
          _
      $region12: #{value_embedding_lookup.1} parent=5 // pred_fallthru
        _
      %p129 = scmp.le.s32.totalorder 1, %s17
      // Predicated region
      $region35: #{value_embedding_lookup.1} parent=5 // pred_check
        %p130 = pneg %p129
      $region36: #{value_embedding_lookup.1} parent=5 // pred_check_branch
        %132 = sbr.rel (%p130) target = $region38
      $region37: #{value_embedding_lookup.1} parent=5 // pred_region
        %s133 = ssub.s32 %s17, 1
        // Predicated region
        $region39: #{value_embedding_lookup.1} parent=37 // pred_check
          %p134 = pneg %p50
        $region40: #{value_embedding_lookup.1} parent=37 // pred_check_branch
          %136 = sbr.rel (%p134) target = $region42
        $region41: #{value_embedding_lookup.1} parent=37 // pred_region
          %s137 = sand.u32 %s41, 1
          %s138 = scalar_lea.sflag [#allocation7], %s137
          %s139 = sand.u32 %s41, 1
          %s140 = smul.addr %s139, 16
          %s141 = scalar_lea.vmem [#allocation6], %s140
          %142 = dma.done %s138, 256
        $region42: #{value_embedding_lookup.1} parent=37 // pred_fallthru
          _
      $region38: #{value_embedding_lookup.1} parent=5 // pred_fallthru
        _
    $region6: #{value_embedding_lookup.1} parent=1 // loop_footer
      %s21 = sadd.s32 1, %s17
    $region7: #{value_embedding_lookup.1} parent=1 // loop_footer_branch
      %16 = sbr.rel target = $region3
    $region8: #{value_embedding_lookup.1} parent=1 // loop_exit
      _
    %143 = vsyncpa [#allocation7], 1
    %s144 = scalar_lea.sflag [#allocation7], 1
    %145 = vsyncpa %s144, 1
  %146 = vsyncmov [#allocation3]
  %s147 = vpop.sfrf %146
  %p148 = scmp.eq.s32.totalorder %s147, 0
  %p149 = pneg %p148
  %151 = shalt.err (%p149)

</llo_original>
